<compile_context>
chip_gen: v5e
topology: v5e:2x2
jax: 0.10.0
libtpu: 0.0.40
codegen_flags: <defaults>
</compile_context>

<pallas_src>
import functools

import jax
import jax.numpy as jnp
from jax.experimental import pallas as pl
from jax.experimental.pallas import tpu as pltpu

COMMITMENT_COST = 0.25  # module default


def _choose_tiling(n_batch, n_classes, n_latent, dtypes, seq_len, max_step_bytes):
    """Pick (batch rows per step, L tile) against a per-step input-byte budget.

    dtypes = (x_itemsize, logits_itemsize, z_itemsize, zq_itemsize).
    """
    bx, bl, bz, bq = dtypes
    per_lane_bytes = bx + n_classes * bl + n_latent * (bz + bq)  # bytes per lane per batch row

    if per_lane_bytes * seq_len <= max_step_bytes:
        tile_l = seq_len                                   # full L (equals full dim -> legal)
    else:
        tile_l = max(128, (max_step_bytes // per_lane_bytes) // 128 * 128)
        # TODO(synk): add a C-tile / online-lse path for huge vocab where even a
        # (C, 128) f32 slab exceeds the per-generation VMEM budget.

    rows_budget = max(1, max_step_bytes // max(1, per_lane_bytes * tile_l))
    b_n = 1
    for d in range(1, n_batch + 1):                        # largest divisor of N within budget
        if n_batch % d == 0 and d <= rows_budget:
            b_n = d
    return b_n, tile_l


def _vq_loss_kernel(tgt_ref, logits_ref, z_ref, zq_ref, out_ref, ce_acc, sq_acc, *,
                    seq_len, tile_l):
    lt = pl.program_id(1)

    # ---- init per-lane accumulators at the start of each batch-block's L sweep ----
    @pl.when(lt == 0)
    def _():
        ce_acc[...] = jnp.zeros_like(ce_acc)
        sq_acc[...] = jnp.zeros_like(sq_acc)

    # ---- cross-entropy per-lane partials for this (batch-block, L-tile) ----
    # logits: (bN, C, tL): C on sublanes, L on lanes.  Cast to f32 in-kernel only.
    logits = logits_ref[...].astype(jnp.float32)
    tgt = tgt_ref[...].astype(jnp.int32)                                    # (bN, 1, tL)

    m = jnp.max(logits, axis=1, keepdims=True)                              # (bN, 1, tL)
    lse = jnp.log(jnp.sum(jnp.exp(logits - m), axis=1, keepdims=True)) + m  # (bN, 1, tL)
    class_iota = jax.lax.broadcasted_iota(jnp.int32, logits.shape, 1)       # (bN, C, tL)
    picked = jnp.sum(jnp.where(class_iota == tgt, logits, 0.0), axis=1, keepdims=True)
    ce = lse - picked                                                       # (bN, 1, tL)

    # ---- MSE per-lane partials (same tile, same DMA pipeline) ----
    diff = zq_ref[...].astype(jnp.float32) - z_ref[...].astype(jnp.float32)  # (bN, D, tL)
    sq = jnp.sum(diff * diff, axis=1, keepdims=True)                         # (bN, 1, tL)

    # Mask padded lanes of a partial trailing L-tile (only emitted when needed).
    if seq_len % tile_l != 0:
        lane = jax.lax.broadcasted_iota(jnp.int32, (1, 1, tile_l), 2)
        valid = (lt * tile_l + lane) < seq_len
        ce = jnp.where(valid, ce, 0.0)
        sq = jnp.where(valid, sq, 0.0)

    # Pure VPU accumulation — no per-step cross-lane reduce, no SMEM scalar dependency.
    ce_acc[...] += ce
    sq_acc[...] += sq

    # ---- finalize this batch block: single cross-lane reduce + lane-dense store ----
    @pl.when(lt == pl.num_programs(1) - 1)
    def _():
        ce_total = jnp.sum(ce_acc[...])
        sq_total = jnp.sum(sq_acc[...])
        row = jax.lax.broadcasted_iota(jnp.int32, (1, 8, 128), 1)
        out_ref[...] = jnp.where(row == 0, ce_total,
                                 jnp.where(row == 1, sq_total, 0.0))


def vq_loss(x, recon_x, z, z_q, commitment_cost=COMMITMENT_COST,
            max_step_bytes=4 * (2 ** 20)):
    """Pallas implementation of VQLoss.forward(x, recon_x, z, z_q) (forward value)."""
    n_batch, n_classes, seq_len = recon_x.shape
    n_latent = z.shape[1]
    assert x.shape == (n_batch, 1, seq_len)
    assert z.shape == (n_batch, n_latent, seq_len) and z_q.shape == z.shape

    dtypes = (jnp.dtype(x.dtype).itemsize, jnp.dtype(recon_x.dtype).itemsize,
              jnp.dtype(z.dtype).itemsize, jnp.dtype(z_q.dtype).itemsize)
    b_n, tile_l = _choose_tiling(n_batch, n_classes, n_latent, dtypes, seq_len,
                                 max_step_bytes)
    n_b_blocks = n_batch // b_n
    n_l_tiles = pl.cdiv(seq_len, tile_l)

    kernel = functools.partial(_vq_loss_kernel, seq_len=seq_len, tile_l=tile_l)

    # VMEM budget: real double-buffered input footprint at actual dtypes + scratch + output.
    in_block_bytes = (dtypes[0] + n_classes * dtypes[1]
                      + n_latent * (dtypes[2] + dtypes[3])) * b_n * tile_l
    scratch_bytes = 2 * b_n * tile_l * 4
    out_bytes = 2 * 8 * 128 * 4
    footprint = 2 * in_block_bytes + scratch_bytes + out_bytes + (4 << 20)  # slack
    vmem_limit = int(min(max(footprint, 32 << 20), 48 << 20))  # 48 MiB safe on v7x (64 MiB phys)

    cost = pl.CostEstimate(
        flops=int(6 * n_batch * n_classes * seq_len + 3 * n_batch * n_latent * seq_len),
        transcendentals=int(n_batch * n_classes * seq_len + n_batch * seq_len),
        bytes_accessed=int(x.nbytes + recon_x.nbytes + z.nbytes + z_q.nbytes
                           + n_b_blocks * 8 * 128 * 4),
    )

    partials = pl.pallas_call(
        kernel,
        out_shape=jax.ShapeDtypeStruct((n_b_blocks, 8, 128), jnp.float32),
        grid=(n_b_blocks, n_l_tiles),  # reduction (L-tile) axis last
        in_specs=[
            pl.BlockSpec((b_n, 1, tile_l), lambda nb, lt: (nb, 0, lt)),          # x (class ids)
            pl.BlockSpec((b_n, n_classes, tile_l), lambda nb, lt: (nb, 0, lt)),  # recon_x (NCL logits)
            pl.BlockSpec((b_n, n_latent, tile_l), lambda nb, lt: (nb, 0, lt)),   # z
            pl.BlockSpec((b_n, n_latent, tile_l), lambda nb, lt: (nb, 0, lt)),   # z_q
        ],
        out_specs=pl.BlockSpec((1, 8, 128), lambda nb, lt: (nb, 0, 0)),
        scratch_shapes=[
            pltpu.VMEM((b_n, 1, tile_l), jnp.float32),   # per-lane CE partial sums
            pltpu.VMEM((b_n, 1, tile_l), jnp.float32),   # per-lane (z_q - z)^2 partial sums
        ],
        compiler_params=pltpu.CompilerParams(
            # Batch-block axis parallel -> megacore split on v7x; L-tile axis is the
            # per-block reduction and stays arbitrary.
            dimension_semantics=("parallel", "arbitrary"),
            vmem_limit_bytes=vmem_limit,
        ),
        cost_estimate=cost,
    )(x, recon_x, z, z_q)

    # Tiny final combine in JAX: sum per-batch-block partials, normalize, add losses.
    ce_sum = jnp.sum(partials[:, 0, 0])
    sq_sum = jnp.sum(partials[:, 1, 0])
    recon_loss = ce_sum / float(n_batch * seq_len)
    mse = sq_sum / float(n_batch * n_latent * seq_len)
    # forward value: codebook_loss == commitment_loss == mean((z_q - z)^2)
    return recon_loss + (1.0 + float(commitment_cost)) * mse


def vq_loss_ref(x, recon_x, z, z_q, commitment_cost=COMMITMENT_COST):
    """Pure-JAX reference matching torch semantics (forward value)."""
    target = jnp.squeeze(x, axis=1).astype(jnp.int32)                   # (N, L)
    logits = jnp.transpose(recon_x, (0, 2, 1)).astype(jnp.float32)      # (N, L, C)
    lse = jax.scipy.special.logsumexp(logits, axis=-1)
    picked = jnp.take_along_axis(logits, target[..., None], axis=-1)[..., 0]
    recon_loss = jnp.mean(lse - picked)
    mse = jnp.mean((z_q.astype(jnp.float32) - z.astype(jnp.float32)) ** 2)
    return recon_loss + mse + commitment_cost * mse


if __name__ == "__main__":
    key = jax.random.PRNGKey(0)

    # ---- case 1: small shapes, full-L tile, both batch rows in one block (bN=2) ----
    N, C, L, D = 2, 16, 16, 8
    k1, k2, k3, k4, key = jax.random.split(key, 5)
    x = jax.random.randint(k1, (N, 1, L), 0, C).astype(jnp.float32)
    recon_x = jax.random.normal(k2, (N, C, L), dtype=jnp.float32)
    z = jax.random.normal(k3, (N, D, L), dtype=jnp.float32)
    z_q = jax.random.normal(k4, (N, D, L), dtype=jnp.float32)

    loss = jax.block_until_ready(vq_loss(x, recon_x, z, z_q))
    ref = jax.block_until_ready(vq_loss_ref(x, recon_x, z, z_q))
    assert jnp.allclose(loss, ref, rtol=1e-4, atol=1e-5), (loss, ref)

    # ---- case 2: longer L, still one full-L batched block under the 4 MiB budget ----
    N2, C2, L2, D2 = 2, 16, 1100, 8
    k1, k2, k3, k4, key = jax.random.split(key, 5)
    x2 = jax.random.randint(k1, (N2, 1, L2), 0, C2).astype(jnp.float32)
    recon_x2 = jax.random.normal(k2, (N2, C2, L2), dtype=jnp.float32)
    z2 = jax.random.normal(k3, (N2, D2, L2), dtype=jnp.float32)
    z_q2 = jax.random.normal(k4, (N2, D2, L2), dtype=jnp.float32)

    loss2 = jax.block_until_ready(vq_loss(x2, recon_x2, z2, z_q2))
    ref2 = jax.block_until_ready(vq_loss_ref(x2, recon_x2, z2, z_q2))
    assert jnp.allclose(loss2, ref2, rtol=1e-4, atol=1e-5), (loss2, ref2)

    # ---- case 3: tiny forced budget -> multi-block batch axis, tiled L with a partial
    #      trailing tile (exercises per-batch partials + lane masking at small shapes) ----
    N3, C3, L3, D3 = 3, 16, 200, 8
    k1, k2, k3, k4, key = jax.random.split(key, 5)
    x3 = jax.random.randint(k1, (N3, 1, L3), 0, C3).astype(jnp.float32)
    recon_x3 = jax.random.normal(k2, (N3, C3, L3), dtype=jnp.float32)
    z3 = jax.random.normal(k3, (N3, D3, L3), dtype=jnp.float32)
    z_q3 = jax.random.normal(k4, (N3, D3, L3), dtype=jnp.float32)

    loss3 = jax.block_until_ready(vq_loss(x3, recon_x3, z3, z_q3,
                                          max_step_bytes=16 * 1024))
    ref3 = jax.block_until_ready(vq_loss_ref(x3, recon_x3, z3, z_q3))
    assert jnp.allclose(loss3, ref3, rtol=1e-4, atol=1e-5), (loss3, ref3)

    # ---- case 4: bf16 inputs (dtype-aware tiling, in-kernel f32 casts only) ----
    k1, k2, k3, k4, key = jax.random.split(key, 5)
    x4 = jax.random.randint(k1, (N, 1, L), 0, C).astype(jnp.float32)
    recon_x4 = jax.random.normal(k2, (N, C, L), dtype=jnp.bfloat16)
    z4 = jax.random.normal(k3, (N, D, L), dtype=jnp.bfloat16)
    z_q4 = jax.random.normal(k4, (N, D, L), dtype=jnp.bfloat16)

    loss4 = jax.block_until_ready(vq_loss(x4, recon_x4, z4, z_q4))
    ref4 = jax.block_until_ready(vq_loss_ref(x4, recon_x4, z4, z_q4))
    assert jnp.allclose(loss4, ref4, rtol=1e-4, atol=1e-5), (loss4, ref4)

    print("KERNEL_OK")
</pallas_src>

<mosaic_0001>
module attributes {stable_mosaic.version = 11 : i64} {
  func.func @_vq_loss_kernel(%arg0: i32, %arg1: i32, %arg2: memref<2x1x16xf32, #tpu.memory_space<vmem>>, %arg3: memref<2x16x16xf32, #tpu.memory_space<vmem>>, %arg4: memref<2x8x16xf32, #tpu.memory_space<vmem>>, %arg5: memref<2x8x16xf32, #tpu.memory_space<vmem>>, %arg6: memref<1x8x128xf32, #tpu.memory_space<vmem>>, %arg7: memref<2x1x16xf32, #tpu.memory_space<vmem>>, %arg8: memref<2x1x16xf32, #tpu.memory_space<vmem>>) attributes {dimension_semantics = [#tpu.dimension_semantics<parallel>, #tpu.dimension_semantics<arbitrary>], iteration_bounds = array<i64: 1, 1>, scalar_prefetch = 0 : i64, scratch_operands = 2 : i64, tpu.core_type = #tpu.core_type<tc>, window_params = [{transform_indices = @transform_0, window_bounds = array<i64: 2, 1, 16>}, {transform_indices = @transform_1, window_bounds = array<i64: 2, 16, 16>}, {transform_indices = @transform_2, window_bounds = array<i64: 2, 8, 16>}, {transform_indices = @transform_3, window_bounds = array<i64: 2, 8, 16>}, {transform_indices = @transform_4, window_bounds = array<i64: 1, 8, 128>}]} {
    %c0_i32 = arith.constant 0 : i32
    %0 = arith.cmpi eq, %arg1, %c0_i32 : i32
    %1 = arith.extui %0 : i1 to i32
    %c0_i32_0 = arith.constant 0 : i32
    %2 = arith.cmpi ne, %1, %c0_i32_0 : i32
    scf.if %2 {
      %cst_30 = arith.constant 0.000000e+00 : f32
      %38 = vector.broadcast %cst_30 : f32 to vector<2x1x16xf32>
      %c0_31 = arith.constant 0 : index
      %c0_32 = arith.constant 0 : index
      %c0_33 = arith.constant 0 : index
      %39 = vector.load %arg7[%c0_31, %c0_32, %c0_33] : memref<2x1x16xf32, #tpu.memory_space<vmem>>, vector<2x1x16xf32>
      tpu.vector_store %arg7[%c0_31, %c0_32, %c0_33], %38 {strides = array<i32>} : memref<2x1x16xf32, #tpu.memory_space<vmem>>, vector<2x1x16xf32>,
      %cst_34 = arith.constant 0.000000e+00 : f32
      %40 = vector.broadcast %cst_34 : f32 to vector<2x1x16xf32>
      %c0_35 = arith.constant 0 : index
      %c0_36 = arith.constant 0 : index
      %c0_37 = arith.constant 0 : index
      %41 = vector.load %arg8[%c0_35, %c0_36, %c0_37] : memref<2x1x16xf32, #tpu.memory_space<vmem>>, vector<2x1x16xf32>
      tpu.vector_store %arg8[%c0_35, %c0_36, %c0_37], %40 {strides = array<i32>} : memref<2x1x16xf32, #tpu.memory_space<vmem>>, vector<2x1x16xf32>,
    } else {
    }
    %c0 = arith.constant 0 : index
    %c0_1 = arith.constant 0 : index
    %c0_2 = arith.constant 0 : index
    %3 = vector.load %arg3[%c0, %c0_1, %c0_2] : memref<2x16x16xf32, #tpu.memory_space<vmem>>, vector<2x16x16xf32>
    %c0_3 = arith.constant 0 : index
    %c0_4 = arith.constant 0 : index
    %c0_5 = arith.constant 0 : index
    %4 = vector.load %arg2[%c0_3, %c0_4, %c0_5] : memref<2x1x16xf32, #tpu.memory_space<vmem>>, vector<2x1x16xf32>
    %5 = arith.fptosi %4 : vector<2x1x16xf32> to vector<2x1x16xi32>
    %cst = arith.constant dense<0xFF800000> : vector<2x16xf32>
    %6 = vector.multi_reduction <maximumf>, %3, %cst [1] : vector<2x16x16xf32> to vector<2x16xf32>
    %7 = vector.shape_cast %6 : vector<2x16xf32> to vector<2x1x16xf32>
    %8 = vector.broadcast %7 : vector<2x1x16xf32> to vector<2x16x16xf32>
    %9 = arith.subf %3, %8 : vector<2x16x16xf32>
    %10 = math.exp %9 : vector<2x16x16xf32>
    %cst_6 = arith.constant dense<0.000000e+00> : vector<2x16xf32>
    %11 = vector.multi_reduction <add>, %10, %cst_6 [1] : vector<2x16x16xf32> to vector<2x16xf32>
    %12 = vector.shape_cast %11 : vector<2x16xf32> to vector<2x1x16xf32>
    %13 = math.log %12 : vector<2x1x16xf32>
    %14 = arith.addf %13, %7 : vector<2x1x16xf32>
    %15 = tpu.iota {dimensions = array<i32: 1>} : vector<2x16x16xi32>
    %16 = vector.broadcast %5 : vector<2x1x16xi32> to vector<2x16x16xi32>
    %17 = arith.cmpi eq, %15, %16 : vector<2x16x16xi32>
    %cst_7 = arith.constant 0.000000e+00 : f32
    %18 = vector.broadcast %cst_7 : f32 to vector<2x16x16xf32>
    %19 = arith.select %17, %3, %18 : vector<2x16x16xi1>, vector<2x16x16xf32>
    %cst_8 = arith.constant dense<0.000000e+00> : vector<2x16xf32>
    %20 = vector.multi_reduction <add>, %19, %cst_8 [1] : vector<2x16x16xf32> to vector<2x16xf32>
    %21 = vector.shape_cast %20 : vector<2x16xf32> to vector<2x1x16xf32>
    %22 = arith.subf %14, %21 : vector<2x1x16xf32>
    %c0_9 = arith.constant 0 : index
    %c0_10 = arith.constant 0 : index
    %c0_11 = arith.constant 0 : index
    %23 = vector.load %arg5[%c0_9, %c0_10, %c0_11] : memref<2x8x16xf32, #tpu.memory_space<vmem>>, vector<2x8x16xf32>
    %c0_12 = arith.constant 0 : index
    %c0_13 = arith.constant 0 : index
    %c0_14 = arith.constant 0 : index
    %24 = vector.load %arg4[%c0_12, %c0_13, %c0_14] : memref<2x8x16xf32, #tpu.memory_space<vmem>>, vector<2x8x16xf32>
    %25 = arith.subf %23, %24 : vector<2x8x16xf32>
    %26 = arith.mulf %25, %25 : vector<2x8x16xf32>
    %cst_15 = arith.constant dense<0.000000e+00> : vector<2x16xf32>
    %27 = vector.multi_reduction <add>, %26, %cst_15 [1] : vector<2x8x16xf32> to vector<2x16xf32>
    %28 = vector.shape_cast %27 : vector<2x16xf32> to vector<2x1x16xf32>
    %c0_16 = arith.constant 0 : index
    %c0_17 = arith.constant 0 : index
    %c0_18 = arith.constant 0 : index
    %29 = vector.load %arg7[%c0_16, %c0_17, %c0_18] : memref<2x1x16xf32, #tpu.memory_space<vmem>>, vector<2x1x16xf32>
    %30 = arith.addf %29, %22 : vector<2x1x16xf32>
    %c0_19 = arith.constant 0 : index
    %c0_20 = arith.constant 0 : index
    %c0_21 = arith.constant 0 : index
    %31 = vector.load %arg7[%c0_19, %c0_20, %c0_21] : memref<2x1x16xf32, #tpu.memory_space<vmem>>, vector<2x1x16xf32>
    tpu.vector_store %arg7[%c0_19, %c0_20, %c0_21], %30 {strides = array<i32>} : memref<2x1x16xf32, #tpu.memory_space<vmem>>, vector<2x1x16xf32>,
    %c0_22 = arith.constant 0 : index
    %c0_23 = arith.constant 0 : index
    %c0_24 = arith.constant 0 : index
    %32 = vector.load %arg8[%c0_22, %c0_23, %c0_24] : memref<2x1x16xf32, #tpu.memory_space<vmem>>, vector<2x1x16xf32>
    %33 = arith.addf %32, %28 : vector<2x1x16xf32>
    %c0_25 = arith.constant 0 : index
    %c0_26 = arith.constant 0 : index
    %c0_27 = arith.constant 0 : index
    %34 = vector.load %arg8[%c0_25, %c0_26, %c0_27] : memref<2x1x16xf32, #tpu.memory_space<vmem>>, vector<2x1x16xf32>
    tpu.vector_store %arg8[%c0_25, %c0_26, %c0_27], %33 {strides = array<i32>} : memref<2x1x16xf32, #tpu.memory_space<vmem>>, vector<2x1x16xf32>,
    %c0_i32_28 = arith.constant 0 : i32
    %35 = arith.cmpi eq, %arg1, %c0_i32_28 : i32
    %36 = arith.extui %35 : i1 to i32
    %c0_i32_29 = arith.constant 0 : i32
    %37 = arith.cmpi ne, %36, %c0_i32_29 : i32
    scf.if %37 {
      %c0_30 = arith.constant 0 : index
      %c0_31 = arith.constant 0 : index
      %c0_32 = arith.constant 0 : index
      %38 = vector.load %arg7[%c0_30, %c0_31, %c0_32] : memref<2x1x16xf32, #tpu.memory_space<vmem>>, vector<2x1x16xf32>
      %39 = vector.shape_cast %38 : vector<2x1x16xf32> to vector<1x2x1x16xf32>
      %cst_33 = arith.constant dense<0.000000e+00> : vector<1xf32>
      %40 = vector.multi_reduction <add>, %39, %cst_33 [1, 2, 3] : vector<1x2x1x16xf32> to vector<1xf32>
      %41 = vector.shape_cast %40 : vector<1xf32> to vector<1x1x1x1xf32>
      %42 = vector.extract %41[0, 0, 0, 0] : f32 from vector<1x1x1x1xf32>
      %c0_34 = arith.constant 0 : index
      %c0_35 = arith.constant 0 : index
      %c0_36 = arith.constant 0 : index
      %43 = vector.load %arg8[%c0_34, %c0_35, %c0_36] : memref<2x1x16xf32, #tpu.memory_space<vmem>>, vector<2x1x16xf32>
      %44 = vector.shape_cast %43 : vector<2x1x16xf32> to vector<1x2x1x16xf32>
      %cst_37 = arith.constant dense<0.000000e+00> : vector<1xf32>
      %45 = vector.multi_reduction <add>, %44, %cst_37 [1, 2, 3] : vector<1x2x1x16xf32> to vector<1xf32>
      %46 = vector.shape_cast %45 : vector<1xf32> to vector<1x1x1x1xf32>
      %47 = vector.extract %46[0, 0, 0, 0] : f32 from vector<1x1x1x1xf32>
      %48 = tpu.iota {dimensions = array<i32: 1>} : vector<1x8x128xi32>
      %c0_i32_38 = arith.constant 0 : i32
      %49 = vector.broadcast %c0_i32_38 : i32 to vector<1x8x128xi32>
      %50 = arith.cmpi eq, %48, %49 : vector<1x8x128xi32>
      %c1_i32 = arith.constant 1 : i32
      %51 = vector.broadcast %c1_i32 : i32 to vector<1x8x128xi32>
      %52 = arith.cmpi eq, %48, %51 : vector<1x8x128xi32>
      %cst_39 = arith.constant 0.000000e+00 : f32
      %53 = vector.broadcast %47 : f32 to vector<1x8x128xf32>
      %54 = vector.broadcast %cst_39 : f32 to vector<1x8x128xf32>
      %55 = arith.select %52, %53, %54 : vector<1x8x128xi1>, vector<1x8x128xf32>
      %56 = vector.broadcast %42 : f32 to vector<1x8x128xf32>
      %57 = arith.select %50, %56, %55 : vector<1x8x128xi1>, vector<1x8x128xf32>
      %c0_40 = arith.constant 0 : index
      %c0_41 = arith.constant 0 : index
      %c0_42 = arith.constant 0 : index
      %58 = vector.load %arg6[%c0_40, %c0_41, %c0_42] : memref<1x8x128xf32, #tpu.memory_space<vmem>>, vector<1x8x128xf32>
      tpu.vector_store %arg6[%c0_40, %c0_41, %c0_42], %57 {strides = array<i32>} : memref<1x8x128xf32, #tpu.memory_space<vmem>>, vector<1x8x128xf32>,
    } else {
    }
    return
  }
  func.func @transform_0(%arg0: i32, %arg1: i32) -> (i32, i32, i32) {
    %c0_i32 = arith.constant 0 : i32
    %c0_i32_0 = arith.constant 0 : i32
    return %arg0, %c0_i32, %arg1 : i32, i32, i32
  }
  func.func @transform_1(%arg0: i32, %arg1: i32) -> (i32, i32, i32) {
    %c0_i32 = arith.constant 0 : i32
    %c0_i32_0 = arith.constant 0 : i32
    return %arg0, %c0_i32, %arg1 : i32, i32, i32
  }
  func.func @transform_2(%arg0: i32, %arg1: i32) -> (i32, i32, i32) {
    %c0_i32 = arith.constant 0 : i32
    %c0_i32_0 = arith.constant 0 : i32
    return %arg0, %c0_i32, %arg1 : i32, i32, i32
  }
  func.func @transform_3(%arg0: i32, %arg1: i32) -> (i32, i32, i32) {
    %c0_i32 = arith.constant 0 : i32
    %c0_i32_0 = arith.constant 0 : i32
    return %arg0, %c0_i32, %arg1 : i32, i32, i32
  }
  func.func @transform_4(%arg0: i32, %arg1: i32) -> (i32, i32, i32) {
    %c0_i32 = arith.constant 0 : i32
    %c0_i32_0 = arith.constant 0 : i32
    %c0_i32_1 = arith.constant 0 : i32
    return %arg0, %c0_i32, %c0_i32_0 : i32, i32, i32
  }
}

</mosaic_0001>

<llo_original>
// kernel: tpu_custom_call.1
$region0: #{tpu_custom_call.1}
  #allocation0 [shape = 'u32[]', space=smem, size = 0x4, offset = 0x4, fixed_abs, tag = 'smem constant byte address 0x4 - core index']
  #allocation1 [shape = 'u32[72,128]{1,0:T(1,128)}', space=vmem, size = 0x9000, scoped, tag = 'internal scratch']
  #allocation2 [shape = 'f32[2,1,16]{2,1,0:T(1,128)}', space=vmem, size = 0x400, scoped, tag = 'scratch operand']
  #allocation3 [shape = 'f32[2,1,16]{2,1,0:T(1,128)}', space=vmem, size = 0x400, scoped, tag = 'scratch operand']
  %s0 = inlined_call_operand.hbm [shape: f32[2,1,16], index: 0, kind: input, shape index: {}]
  %s1 = inlined_call_operand.hbm [shape: f32[2,16,16], index: 1, kind: input, shape index: {}]
  %s2 = inlined_call_operand.hbm [shape: f32[2,8,16], index: 2, kind: input, shape index: {}]
  %s3 = inlined_call_operand.hbm [shape: f32[2,8,16], index: 3, kind: input, shape index: {}]
  %s4 = inlined_call_operand.hbm [shape: f32[1,8,128], index: 4, kind: output, shape index: {}]
  %s5 = sld [smem:[#allocation0]]
  $region50: #{tpu_custom_call.1} parent=0
    _
  %s7 = ssub.s32 1, %s5
  %s8 = scalar_select 0, %s7, %s5
  $region1: #{tpu_custom_call.1} parent=0
    #allocation4 [shape = 'u8[1024]{0}', space=vmem, size = 0x400, scoped, tag = 'input window, operand 0, single buffered']
    #allocation5 [shape = 's32[1]{0}', space=sflag, size = 0x4, scoped, tag = 'scoped memory for tpu_custom_call.1']
    #allocation6 [shape = 's32[1]{0}', space=sflag, size = 0x4, scoped, tag = 'scoped memory for tpu_custom_call.1']
    #allocation7 [shape = 'u8[16384]{0}', space=vmem, size = 0x4000, scoped, tag = 'input window, operand 1, single buffered']
    #allocation8 [shape = 's32[1]{0}', space=sflag, size = 0x4, scoped, tag = 'scoped memory for tpu_custom_call.1']
    #allocation9 [shape = 'u8[8192]{0}', space=vmem, size = 0x2000, scoped, tag = 'input window, operand 2, single buffered']
    #allocation10 [shape = 'u8[8192]{0}', space=vmem, size = 0x2000, scoped, tag = 'input window, operand 3, single buffered']
    #allocation11 [shape = 's32[1]{0}', space=sflag, size = 0x4, scoped, tag = 'scoped memory for tpu_custom_call.1']
    #allocation12 [shape = 'u8[4096]{0}', space=vmem, size = 0x1000, scoped, tag = 'output window, operand 0, single buffered']
    %9 = vsyncpa [#allocation5], 0
    %10 = vsyncpa [#allocation8], 0
    %11 = vsyncpa [#allocation11], 0
    %12 = vsyncpa [#allocation6], 0
    // Predicated region
    $region2: #{tpu_custom_call.1} parent=1 // pred_check
      _
    $region3: #{tpu_custom_call.1} parent=1 // pred_check_branch
      %14 = sbr.rel (0) target = $region5
    $region4: #{tpu_custom_call.1} parent=1 // pred_region
      %16 = vsyncadd [#allocation5], 0
      %s17 = sshll.u32 %s0, 4
      %s18 = int_to_ptr.hbm [resolvable:$true] %s17
      %s19 = sshll.u32 [#allocation4], 4
      %s20 = int_to_ptr.vmem [resolvable:$true] %s19
      %25 = dma.hbm_to_vmem [thread:$0]  %s18, 32, %s20, [#allocation5], 16, 16, 1
    $region5: #{tpu_custom_call.1} parent=1 // pred_fallthru
      _
    // Predicated region
    $region6: #{tpu_custom_call.1} parent=1 // pred_check
      _
    $region7: #{tpu_custom_call.1} parent=1 // pred_check_branch
      %27 = sbr.rel (0) target = $region9
    $region8: #{tpu_custom_call.1} parent=1 // pred_region
      %29 = vsyncadd [#allocation8], 0
      %s30 = sshll.u32 %s1, 4
      %s31 = int_to_ptr.hbm [resolvable:$true] %s30
      %s32 = sshll.u32 [#allocation7], 4
      %s33 = int_to_ptr.vmem [resolvable:$true] %s32
      %38 = dma.hbm_to_vmem [thread:$0]  %s31, 512, %s33, [#allocation8], 128, 128, 8
    $region9: #{tpu_custom_call.1} parent=1 // pred_fallthru
      _
    // Predicated region
    $region10: #{tpu_custom_call.1} parent=1 // pred_check
      _
    $region11: #{tpu_custom_call.1} parent=1 // pred_check_branch
      %40 = sbr.rel (0) target = $region13
    $region12: #{tpu_custom_call.1} parent=1 // pred_region
      %42 = vsyncadd [#allocation8], 0
      %s43 = sshll.u32 %s2, 4
      %s44 = int_to_ptr.hbm [resolvable:$true] %s43
      %s45 = sshll.u32 [#allocation9], 4
      %s46 = int_to_ptr.vmem [resolvable:$true] %s45
      %51 = dma.hbm_to_vmem [thread:$0]  %s44, 256, %s46, [#allocation8], 128, 128, 8
    $region13: #{tpu_custom_call.1} parent=1 // pred_fallthru
      _
    // Predicated region
    $region14: #{tpu_custom_call.1} parent=1 // pred_check
      _
    $region15: #{tpu_custom_call.1} parent=1 // pred_check_branch
      %53 = sbr.rel (0) target = $region17
    $region16: #{tpu_custom_call.1} parent=1 // pred_region
      %55 = vsyncadd [#allocation11], 0
      %s56 = sshll.u32 %s3, 4
      %s57 = int_to_ptr.hbm [resolvable:$true] %s56
      %s58 = sshll.u32 [#allocation10], 4
      %s59 = int_to_ptr.vmem [resolvable:$true] %s58
      %64 = dma.hbm_to_vmem [thread:$0]  %s57, 256, %s59, [#allocation11], 128, 128, 8
    $region17: #{tpu_custom_call.1} parent=1 // pred_fallthru
      _
    // Predicated region
    $region18: #{tpu_custom_call.1} parent=1 // pred_check
      _
    $region19: #{tpu_custom_call.1} parent=1 // pred_check_branch
      %66 = sbr.rel (0) target = $region21
    $region20: #{tpu_custom_call.1} parent=1 // pred_region
      %68 = dma.done [#allocation5], 32
    $region21: #{tpu_custom_call.1} parent=1 // pred_fallthru
      _
    // Predicated region
    $region22: #{tpu_custom_call.1} parent=1 // pred_check
      _
    $region23: #{tpu_custom_call.1} parent=1 // pred_check_branch
      %70 = sbr.rel (0) target = $region25
    $region24: #{tpu_custom_call.1} parent=1 // pred_region
      %72 = dma.done [#allocation8], 512
    $region25: #{tpu_custom_call.1} parent=1 // pred_fallthru
      _
    // Predicated region
    $region26: #{tpu_custom_call.1} parent=1 // pred_check
      _
    $region27: #{tpu_custom_call.1} parent=1 // pred_check_branch
      %74 = sbr.rel (0) target = $region29
    $region28: #{tpu_custom_call.1} parent=1 // pred_region
      %76 = dma.done [#allocation8], 256
    $region29: #{tpu_custom_call.1} parent=1 // pred_fallthru
      _
    // Predicated region
    $region30: #{tpu_custom_call.1} parent=1 // pred_check
      _
    $region31: #{tpu_custom_call.1} parent=1 // pred_check_branch
      %78 = sbr.rel (0) target = $region33
    $region32: #{tpu_custom_call.1} parent=1 // pred_region
      %80 = dma.done [#allocation11], 256
    $region33: #{tpu_custom_call.1} parent=1 // pred_fallthru
      _
    %p81 = scmp.eq.s32.totalorder 0, 0
    // Predicated region
    $region34: #{tpu_custom_call.1} parent=1 // pred_check
      %p82 = pneg %p81
    $region35: #{tpu_custom_call.1} parent=1 // pred_check_branch
      %84 = sbr.rel (%p82) target = $region37
    $region36: #{tpu_custom_call.1} parent=1 // pred_region
      %vm85 = vcmask 122880
      %86 = vst.msk [vmem:[#allocation2] sm:$0x1] %vm85, 0.0
      %87 = vst.msk [vmem:[#allocation2 + $0x1] sm:$0x1] %vm85, 0.0
      %88 = vst.msk [vmem:[#allocation3] sm:$0x1] %vm85, 0.0
      %89 = vst.msk [vmem:[#allocation3 + $0x1] sm:$0x1] %vm85, 0.0
    $region37: #{tpu_custom_call.1} parent=1 // pred_fallthru
      _
    %v90 = vld [vmem:[#allocation7] sm:$0xff]
    %v91 = vld [vmem:[#allocation7 + $0x8] sm:$0xff]
    %v92 = vld [vmem:[#allocation7 + $0x10] sm:$0xff]
    %v93 = vld [vmem:[#allocation7 + $0x18] sm:$0xff]
    %v94 = vld [vmem:[#allocation4] sm:$0x1]
    %v95 = vld [vmem:[#allocation4 + $0x1] sm:$0x1]
    %v96 = vcvt.f32.s32.to.zero.pseudo %v94
    %v97 = vcvt.f32.s32.to.zero.pseudo %v95
    %vm98 = vcmask 130048
    %v99 = vsel %vm98, %v90, -inf
    %v100 = vsel %vm98, %v91, -inf
    %v101 = vmax.f32 %v99, %v100
    %v102 = vrot.slane %v101, 4
    %v103 = vmax.f32 %v101, %v102
    %v104 = vrot.slane %v103, 2
    %v105 = vmax.f32 %v103, %v104
    %v106 = vrot.slane %v105, 1
    %v107 = vmax.f32 %v105, %v106
    %v108 = vsel %vm98, %v92, -inf
    %v109 = vsel %vm98, %v93, -inf
    %v110 = vmax.f32 %v108, %v109
    %v111 = vrot.slane %v110, 4
    %v112 = vmax.f32 %v110, %v111
    %v113 = vrot.slane %v112, 2
    %v114 = vmax.f32 %v112, %v113
    %v115 = vrot.slane %v114, 1
    %v116 = vmax.f32 %v114, %v115
    %v117 = vsub.f32 %v90, %v107
    %v118 = vsub.f32 %v91, %v107
    %v119 = vsub.f32 %v92, %v116
    %v120 = vsub.f32 %v93, %v116
    %v121 = vmul.f32 %v117, 1.442695
    %v122 = vpow.pop %v121
    %v123 = vmul.f32 %v118, 1.442695
    %v124 = vpow.pop %v123
    %v125 = vmul.f32 %v119, 1.442695
    %v126 = vpow.pop %v125
    %v127 = vmul.f32 %v120, 1.442695
    %v128 = vpow.pop %v127
    %v129 = vsel %vm98, %v122, 0.0
    %v130 = vsel %vm98, %v124, 0.0
    %v131 = vadd.f32 %v129, %v130
    %v132 = vrot.slane %v131, 4
    %v133 = vadd.f32 %v131, %v132
    %v134 = vrot.slane %v133, 2
    %v135 = vadd.f32 %v133, %v134
    %v136 = vrot.slane %v135, 1
    %v137 = vadd.f32 %v135, %v136
    %v138 = vsel %vm98, %v126, 0.0
    %v139 = vsel %vm98, %v128, 0.0
    %v140 = vadd.f32 %v138, %v139
    %v141 = vrot.slane %v140, 4
    %v142 = vadd.f32 %v140, %v141
    %v143 = vrot.slane %v142, 2
    %v144 = vadd.f32 %v142, %v143
    %v145 = vrot.slane %v144, 1
    %v146 = vadd.f32 %v144, %v145
    %v147 = vlog2.pop %v137
    %v148 = vmul.f32 %v147, 0.6931472
    %v149 = vlog2.pop %v146
    %v150 = vmul.f32 %v149, 0.6931472
    %v151 = vadd.f32 %v148, %v107
    %v152 = vadd.f32 %v150, %v116
    %v153 = vlaneseq
    %v154 = vshrl.u32 %v153, 7
    %v155 = vadd.s32 %v154, 8
    %v156 = vperm.slane %v96, 0
    %v157 = vperm.slane %v97, 0
    %vm158 = vcmp.eq.s32.totalorder %v154, %v156
    %vm159 = vcmp.eq.s32.totalorder %v155, %v156
    %vm160 = vcmp.eq.s32.totalorder %v154, %v157
    %vm161 = vcmp.eq.s32.totalorder %v155, %v157
    %v162 = vsel %vm158, %v90, 0.0
    %v163 = vsel %vm159, %v91, 0.0
    %v164 = vsel %vm160, %v92, 0.0
    %v165 = vsel %vm161, %v93, 0.0
    %v166 = vsel %vm98, %v162, 0.0
    %v167 = vsel %vm98, %v163, 0.0
    %v168 = vadd.f32 %v166, %v167
    %v169 = vrot.slane %v168, 4
    %v170 = vadd.f32 %v168, %v169
    %v171 = vrot.slane %v170, 2
    %v172 = vadd.f32 %v170, %v171
    %v173 = vrot.slane %v172, 1
    %v174 = vadd.f32 %v172, %v173
    %v175 = vsel %vm98, %v164, 0.0
    %v176 = vsel %vm98, %v165, 0.0
    %v177 = vadd.f32 %v175, %v176
    %v178 = vrot.slane %v177, 4
    %v179 = vadd.f32 %v177, %v178
    %v180 = vrot.slane %v179, 2
    %v181 = vadd.f32 %v179, %v180
    %v182 = vrot.slane %v181, 1
    %v183 = vadd.f32 %v181, %v182
    %v184 = vsub.f32 %v151, %v174
    %v185 = vsub.f32 %v152, %v183
    %v186 = vld [vmem:[#allocation10] sm:$0xff]
    %v187 = vld [vmem:[#allocation10 + $0x8] sm:$0xff]
    %v188 = vld [vmem:[#allocation9] sm:$0xff]
    %v189 = vld [vmem:[#allocation9 + $0x8] sm:$0xff]
    %v190 = vsub.f32 %v186, %v188
    %v191 = vsub.f32 %v187, %v189
    %v192 = vmul.f32 %v190, %v190
    %v193 = vmul.f32 %v191, %v191
    %v194 = vsel %vm98, %v192, 0.0
    %v195 = vrot.slane %v194, 4
    %v196 = vadd.f32 %v194, %v195
    %v197 = vrot.slane %v196, 2
    %v198 = vadd.f32 %v196, %v197
    %v199 = vrot.slane %v198, 1
    %v200 = vadd.f32 %v198, %v199
    %v201 = vsel %vm98, %v193, 0.0
    %v202 = vrot.slane %v201, 4
    %v203 = vadd.f32 %v201, %v202
    %v204 = vrot.slane %v203, 2
    %v205 = vadd.f32 %v203, %v204
    %v206 = vrot.slane %v205, 1
    %v207 = vadd.f32 %v205, %v206
    %v208 = vld [vmem:[#allocation2] sm:$0x1]
    %v209 = vld [vmem:[#allocation2 + $0x1] sm:$0x1]
    %v210 = vadd.f32 %v208, %v184
    %v211 = vadd.f32 %v209, %v185
    %vm212 = vcmask 122880
    %213 = vst.msk [vmem:[#allocation2] sm:$0x1] %vm212, %v210
    %214 = vst.msk [vmem:[#allocation2 + $0x1] sm:$0x1] %vm212, %v211
    %v215 = vld [vmem:[#allocation3] sm:$0x1]
    %v216 = vld [vmem:[#allocation3 + $0x1] sm:$0x1]
    %v217 = vadd.f32 %v215, %v200
    %v218 = vadd.f32 %v216, %v207
    %219 = vst.msk [vmem:[#allocation3] sm:$0x1] %vm212, %v217
    %220 = vst.msk [vmem:[#allocation3 + $0x1] sm:$0x1] %vm212, %v218
    // Predicated region
    $region38: #{tpu_custom_call.1} parent=1 // pred_check
      %p221 = pneg %p81
    $region39: #{tpu_custom_call.1} parent=1 // pred_check_branch
      %223 = sbr.rel (%p221) target = $region41
    $region40: #{tpu_custom_call.1} parent=1 // pred_region
      %v224 = vld [vmem:[#allocation2] sm:$0x1]
      %v225 = vld [vmem:[#allocation2 + $0x1] sm:$0x1]
      %v226 = vsel %vm212, %v224, 0.0
      %v227 = vsel %vm212, %v225, 0.0
      %v228 = vadd.f32 %v226, %v227
      %229 = vadd.xlane.f32.xlu0 %v228
      %v230 = vpop.xlane.xlu0 %229
      %v231 = vrot.slane %v230, 4
      %v232 = vadd.f32 %v230, %v231
      %v233 = vrot.slane %v232, 2
      %v234 = vadd.f32 %v232, %v233
      %v235 = vrot.slane %v234, 1
      %v236 = vadd.f32 %v234, %v235
      %s237 = vtos %v236
      %v238 = vld [vmem:[#allocation3] sm:$0x1]
      %v239 = vld [vmem:[#allocation3 + $0x1] sm:$0x1]
      %v240 = vsel %vm212, %v238, 0.0
      %v241 = vsel %vm212, %v239, 0.0
      %v242 = vadd.f32 %v240, %v241
      %243 = vadd.xlane.f32.xlu0 %v242
      %v244 = vpop.xlane.xlu0 %243
      %v245 = vrot.slane %v244, 4
      %v246 = vadd.f32 %v244, %v245
      %v247 = vrot.slane %v246, 2
      %v248 = vadd.f32 %v246, %v247
      %v249 = vrot.slane %v248, 1
      %v250 = vadd.f32 %v248, %v249
      %s251 = vtos %v250
      %vm252 = vcmp.eq.s32.totalorder %v154, 0
      %vm253 = vcmp.eq.s32.totalorder %v154, 1
      %v254 = vstv %s251
      %v255 = vsel %vm253, %v254, 0.0
      %v256 = vstv %s237
      %v257 = vsel %vm252, %v256, %v255
      %258 = vst [vmem:[#allocation12] sm:$0xff] %v257
    $region41: #{tpu_custom_call.1} parent=1 // pred_fallthru
      _
    // Predicated region
    $region42: #{tpu_custom_call.1} parent=1 // pred_check
      _
    $region43: #{tpu_custom_call.1} parent=1 // pred_check_branch
      %260 = sbr.rel (0) target = $region45
    $region44: #{tpu_custom_call.1} parent=1 // pred_region
      %262 = vsyncadd [#allocation6], 0
      %s264 = sshll.u32 [#allocation12], 4
      %s265 = int_to_ptr.vmem [resolvable:$true] %s264
      %s266 = sshll.u32 %s4, 4
      %s267 = int_to_ptr.hbm [resolvable:$true] %s266
      %269 = dma.vmem_to_hbm [thread:$0]  %s265, 128, %s267, [#allocation6]
    $region45: #{tpu_custom_call.1} parent=1 // pred_fallthru
      _
    // Predicated region
    $region46: #{tpu_custom_call.1} parent=1 // pred_check
      _
    $region47: #{tpu_custom_call.1} parent=1 // pred_check_branch
      %271 = sbr.rel (0) target = $region49
    $region48: #{tpu_custom_call.1} parent=1 // pred_region
      %273 = dma.done [#allocation6], 128
    $region49: #{tpu_custom_call.1} parent=1 // pred_fallthru
      _
    %274 = vsyncpa [#allocation5], 1
    %275 = vsyncpa [#allocation8], 1
    %276 = vsyncpa [#allocation11], 1
    %277 = vsyncpa [#allocation6], 1

</llo_original>
